<compile_context>
chip_gen: v7x
topology: tpu7x:2x2x1
jax: 0.10.0
libtpu: 0.0.40
codegen_flags: <defaults>
</compile_context>

<pallas_src>
import jax
import jax.numpy as jnp
from jax.experimental import pallas as pl
from jax.experimental.pallas import tpu as pltpu

IGNORE_INDEX = -100


def _ce_kernel(logits_ref, labels_ref, out_ref):
    """One row-block: write (loss_sum, valid_count) packed into a lane-dense tile."""
    logits = logits_ref[...].astype(jnp.float32)            # (TN, V) f32
    labels = labels_ref[...]                                 # (TN, 1) int32

    # Numerically stable log-softmax pieces; row_max cancels between lse and picked.
    row_max = jnp.max(logits, axis=-1, keepdims=True)        # (TN, 1)
    shifted = logits - row_max                                # (TN, V)

    col = jax.lax.broadcasted_iota(jnp.int32, shifted.shape, 1)
    picked = jnp.sum(jnp.where(col == labels, shifted, 0.0),
                     axis=-1, keepdims=True)                  # (TN, 1) shifted logit @ label
    lse = jnp.log(jnp.sum(jnp.exp(shifted), axis=-1, keepdims=True))  # (TN, 1)

    valid = labels != IGNORE_INDEX
    nll = jnp.where(valid, lse - picked, 0.0)                 # (TN, 1)

    loss_sum = jnp.sum(nll)
    cnt = jnp.sum(valid.astype(jnp.float32))

    # Pack the two scalars into an (1, 8, 128) lane-dense block: [0,0,0]=sum, [0,0,1]=count.
    sub = jax.lax.broadcasted_iota(jnp.int32, out_ref.shape, 1)
    lane = jax.lax.broadcasted_iota(jnp.int32, out_ref.shape, 2)
    out_ref[...] = jnp.where((sub == 0) & (lane == 0), loss_sum,
                             jnp.where((sub == 0) & (lane == 1), cnt, 0.0))


def lm_loss(logits, labels, *, tile_n=None, target_block_bytes=4 * 1024 * 1024):
    """Cross-entropy loss, mean over non-ignored tokens.

    logits: (..., V) float (f32 or bf16; NOT upcast before the kernel).
    labels: (...) integer with same leading dims; -100 entries are ignored.
    """
    V = logits.shape[-1]
    logits2d = logits.reshape(-1, V)
    labels2d = labels.reshape(-1, 1).astype(jnp.int32)
    N = logits2d.shape[0]
    dtype_bytes = jnp.dtype(logits2d.dtype).itemsize

    # Vocab-aware row tile: ~target_block_bytes of logits per block, multiple of 8,
    # capped at 256 rows so double-buffered inputs + f32 temps fit v7x's 64 MiB VMEM.
    if tile_n is None:
        tile_n = target_block_bytes // max(1, V * dtype_bytes)
        tile_n = min(256, tile_n)
    tile_n = min(tile_n, ((N + 7) // 8) * 8)      # don't exceed (padded) row count
    tile_n = max(8, (tile_n // 8) * 8)            # multiple of 8 sublanes

    # Pad token rows to a multiple of tile_n with ignore_index (contributes nothing).
    pad = (-N) % tile_n
    if pad:
        logits2d = jnp.pad(logits2d, ((0, pad), (0, 0)))
        labels2d = jnp.pad(labels2d, ((0, pad), (0, 0)),
                           constant_values=IGNORE_INDEX)
    Np = logits2d.shape[0]
    G = Np // tile_n

    cost = pl.CostEstimate(
        flops=int(3 * Np * V),                    # max/sub/add-reduce, rough
        transcendentals=int(Np * V),              # exp per element (+ log per row)
        bytes_accessed=int(Np * V * dtype_bytes + Np * 4 + G * 8 * 128 * 4),
    )

    partials = pl.pallas_call(
        _ce_kernel,
        out_shape=jax.ShapeDtypeStruct((G, 8, 128), jnp.float32),
        grid_spec=pltpu.PrefetchScalarGridSpec(
            num_scalar_prefetch=0,
            grid=(G,),
            in_specs=[
                pl.BlockSpec((tile_n, V), lambda i: (i, 0)),
                pl.BlockSpec((tile_n, 1), lambda i: (i, 0)),
            ],
            out_specs=pl.BlockSpec((1, 8, 128), lambda i: (i, 0, 0)),
        ),
        compiler_params=pltpu.CompilerParams(
            dimension_semantics=("parallel",),       # independent row blocks -> megacore on v7x
            vmem_limit_bytes=48 * 1024 * 1024,
        ),
        cost_estimate=cost,
    )(logits2d, labels2d)

    loss_sum = jnp.sum(partials[:, 0, 0])
    count = jnp.sum(partials[:, 0, 1])
    # TODO(synk): all-tokens-ignored yields 0/0 = NaN, matching PyTorch's behavior.
    return loss_sum / count


def _reference_loss(logits, labels):
    V = logits.shape[-1]
    lg = logits.reshape(-1, V).astype(jnp.float32)
    lb = labels.reshape(-1)
    logp = jax.nn.log_softmax(lg, axis=-1)
    valid = lb != IGNORE_INDEX
    safe_lb = jnp.where(valid, lb, 0)
    nll = -jnp.take_along_axis(logp, safe_lb[:, None], axis=-1)[:, 0]
    nll = jnp.where(valid, nll, 0.0)
    return jnp.sum(nll) / jnp.sum(valid.astype(jnp.float32))


if __name__ == "__main__":
    key = jax.random.PRNGKey(0)
    k1, k2, k3, k4 = jax.random.split(key, 4)

    # Small shapes consistent with the module: logits (batch, seq, vocab), labels (batch, seq).
    batch, seq, vocab = 2, 8, 32
    logits = jax.random.normal(k1, (batch, seq, vocab), dtype=jnp.float32)
    labels = jax.random.randint(k2, (batch, seq), 0, vocab, dtype=jnp.int32)
    labels = labels.at[0, 0].set(IGNORE_INDEX)   # exercise ignore_index masking

    loss = jax.block_until_ready(lm_loss(logits, labels))
    ref = _reference_loss(logits, labels)
    assert jnp.allclose(loss, ref, atol=1e-5, rtol=1e-5), (loss, ref)

    # Second check: multiple row blocks + padding + bf16 logits in HBM.
    b2, s2, v2 = 4, 60, 512                       # N=240 -> pad to 256 with tile_n=64, G=4
    logits_b = jax.random.normal(k3, (b2, s2, v2), dtype=jnp.float32)
    labels_b = jax.random.randint(k4, (b2, s2), 0, v2, dtype=jnp.int32)
    labels_b = labels_b.at[1, 3].set(IGNORE_INDEX)
    logits_bf16 = logits_b.astype(jnp.bfloat16)

    loss_b = jax.block_until_ready(lm_loss(logits_bf16, labels_b, tile_n=64))
    ref_b = _reference_loss(logits_bf16.astype(jnp.float32), labels_b)
    assert jnp.allclose(loss_b, ref_b, atol=2e-3, rtol=2e-3), (loss_b, ref_b)

    print("KERNEL_OK")
</pallas_src>

<mosaic_0001>
module attributes {stable_mosaic.version = 11 : i64} {
  func.func @_ce_kernel(%arg0: i32, %arg1: memref<16x32xf32, #tpu.memory_space<vmem>>, %arg2: memref<16x1xi32, #tpu.memory_space<vmem>>, %arg3: memref<1x8x128xf32, #tpu.memory_space<vmem>>) attributes {dimension_semantics = [#tpu.dimension_semantics<parallel>], iteration_bounds = array<i64: 1>, scalar_prefetch = 0 : i64, scratch_operands = 0 : i64, tpu.core_type = #tpu.core_type<tc>, window_params = [{transform_indices = @transform_0, window_bounds = array<i64: 16, 32>}, {transform_indices = @transform_1, window_bounds = array<i64: 16, 1>}, {transform_indices = @transform_2, window_bounds = array<i64: 1, 8, 128>}]} {
    %c0 = arith.constant 0 : index
    %c0_0 = arith.constant 0 : index
    %0 = vector.load %arg1[%c0, %c0_0] : memref<16x32xf32, #tpu.memory_space<vmem>>, vector<16x32xf32>
    %c0_1 = arith.constant 0 : index
    %c0_2 = arith.constant 0 : index
    %1 = vector.load %arg2[%c0_1, %c0_2] : memref<16x1xi32, #tpu.memory_space<vmem>>, vector<16x1xi32>
    %cst = arith.constant dense<0xFF800000> : vector<16xf32>
    %2 = vector.multi_reduction <maximumf>, %0, %cst [1] : vector<16x32xf32> to vector<16xf32>
    %3 = vector.shape_cast %2 : vector<16xf32> to vector<16x1xf32>
    %4 = vector.broadcast %3 : vector<16x1xf32> to vector<16x32xf32>
    %5 = arith.subf %0, %4 : vector<16x32xf32>
    %6 = tpu.iota {dimensions = array<i32: 1>} : vector<16x32xi32>
    %7 = vector.broadcast %1 : vector<16x1xi32> to vector<16x32xi32>
    %8 = arith.cmpi eq, %6, %7 : vector<16x32xi32>
    %cst_3 = arith.constant 0.000000e+00 : f32
    %9 = vector.broadcast %cst_3 : f32 to vector<16x32xf32>
    %10 = arith.select %8, %5, %9 : vector<16x32xi1>, vector<16x32xf32>
    %cst_4 = arith.constant dense<0.000000e+00> : vector<16xf32>
    %11 = vector.multi_reduction <add>, %10, %cst_4 [1] : vector<16x32xf32> to vector<16xf32>
    %12 = vector.shape_cast %11 : vector<16xf32> to vector<16x1xf32>
    %13 = math.exp %5 : vector<16x32xf32>
    %cst_5 = arith.constant dense<0.000000e+00> : vector<16xf32>
    %14 = vector.multi_reduction <add>, %13, %cst_5 [1] : vector<16x32xf32> to vector<16xf32>
    %15 = vector.shape_cast %14 : vector<16xf32> to vector<16x1xf32>
    %16 = math.log %15 : vector<16x1xf32>
    %c-100_i32 = arith.constant -100 : i32
    %17 = vector.broadcast %c-100_i32 : i32 to vector<16x1xi32>
    %18 = arith.cmpi ne, %1, %17 : vector<16x1xi32>
    %19 = arith.subf %16, %12 : vector<16x1xf32>
    %cst_6 = arith.constant 0.000000e+00 : f32
    %20 = vector.broadcast %cst_6 : f32 to vector<16x1xf32>
    %21 = arith.select %18, %19, %20 : vector<16x1xi1>, vector<16x1xf32>
    %22 = vector.shape_cast %21 : vector<16x1xf32> to vector<1x16x1xf32>
    %cst_7 = arith.constant dense<0.000000e+00> : vector<1xf32>
    %23 = vector.multi_reduction <add>, %22, %cst_7 [1, 2] : vector<1x16x1xf32> to vector<1xf32>
    %24 = vector.shape_cast %23 : vector<1xf32> to vector<1x1x1xf32>
    %25 = vector.extract %24[0, 0, 0] : f32 from vector<1x1x1xf32>
    %26 = arith.extui %18 : vector<16x1xi1> to vector<16x1xi32>
    %27 = arith.sitofp %26 : vector<16x1xi32> to vector<16x1xf32>
    %28 = vector.shape_cast %27 : vector<16x1xf32> to vector<1x16x1xf32>
    %cst_8 = arith.constant dense<0.000000e+00> : vector<1xf32>
    %29 = vector.multi_reduction <add>, %28, %cst_8 [1, 2] : vector<1x16x1xf32> to vector<1xf32>
    %30 = vector.shape_cast %29 : vector<1xf32> to vector<1x1x1xf32>
    %31 = vector.extract %30[0, 0, 0] : f32 from vector<1x1x1xf32>
    %32 = tpu.iota {dimensions = array<i32: 1>} : vector<1x8x128xi32>
    %33 = tpu.iota {dimensions = array<i32: 2>} : vector<1x8x128xi32>
    %c0_i32 = arith.constant 0 : i32
    %34 = vector.broadcast %c0_i32 : i32 to vector<1x8x128xi32>
    %35 = arith.cmpi eq, %32, %34 : vector<1x8x128xi32>
    %c0_i32_9 = arith.constant 0 : i32
    %36 = vector.broadcast %c0_i32_9 : i32 to vector<1x8x128xi32>
    %37 = arith.cmpi eq, %33, %36 : vector<1x8x128xi32>
    %38 = arith.andi %35, %37 : vector<1x8x128xi1>
    %c0_i32_10 = arith.constant 0 : i32
    %39 = vector.broadcast %c0_i32_10 : i32 to vector<1x8x128xi32>
    %40 = arith.cmpi eq, %32, %39 : vector<1x8x128xi32>
    %c1_i32 = arith.constant 1 : i32
    %41 = vector.broadcast %c1_i32 : i32 to vector<1x8x128xi32>
    %42 = arith.cmpi eq, %33, %41 : vector<1x8x128xi32>
    %43 = arith.andi %40, %42 : vector<1x8x128xi1>
    %cst_11 = arith.constant 0.000000e+00 : f32
    %44 = vector.broadcast %31 : f32 to vector<1x8x128xf32>
    %45 = vector.broadcast %cst_11 : f32 to vector<1x8x128xf32>
    %46 = arith.select %43, %44, %45 : vector<1x8x128xi1>, vector<1x8x128xf32>
    %47 = vector.broadcast %25 : f32 to vector<1x8x128xf32>
    %48 = arith.select %38, %47, %46 : vector<1x8x128xi1>, vector<1x8x128xf32>
    %c0_12 = arith.constant 0 : index
    %c0_13 = arith.constant 0 : index
    %c0_14 = arith.constant 0 : index
    %49 = vector.load %arg3[%c0_12, %c0_13, %c0_14] : memref<1x8x128xf32, #tpu.memory_space<vmem>>, vector<1x8x128xf32>
    tpu.vector_store %arg3[%c0_12, %c0_13, %c0_14], %48 {strides = array<i32>} : memref<1x8x128xf32, #tpu.memory_space<vmem>>, vector<1x8x128xf32>,
    return
  }
  func.func @transform_0(%arg0: i32) -> (i32, i32) {
    %c0_i32 = arith.constant 0 : i32
    %c0_i32_0 = arith.constant 0 : i32
    return %arg0, %c0_i32 : i32, i32
  }
  func.func @transform_1(%arg0: i32) -> (i32, i32) {
    %c0_i32 = arith.constant 0 : i32
    %c0_i32_0 = arith.constant 0 : i32
    return %arg0, %c0_i32 : i32, i32
  }
  func.func @transform_2(%arg0: i32) -> (i32, i32, i32) {
    %c0_i32 = arith.constant 0 : i32
    %c0_i32_0 = arith.constant 0 : i32
    %c0_i32_1 = arith.constant 0 : i32
    return %arg0, %c0_i32, %c0_i32_0 : i32, i32, i32
  }
}

</mosaic_0001>

<llo_original>
// kernel: tpu_custom_call.1
$region0: #{tpu_custom_call.1}
  #allocation0 [shape = 'u32[]', space=smem, size = 0x4, offset = 0x4, fixed_abs, tag = 'smem constant byte address 0x4 - core index']
  #allocation1 [shape = 'u32[144,128]{1,0:T(1,128)}', space=vmem, size = 0x12000, scoped, tag = 'internal scratch']
  %s0 = inlined_call_operand.vmem [shape: f32[16,32], index: 0, kind: input, shape index: {}]
  %s1 = inlined_call_operand.vmem [shape: s32[16,1], index: 1, kind: input, shape index: {}]
  %s2 = inlined_call_operand.hbm [shape: f32[1,8,128], index: 2, kind: output, shape index: {}]
  %s3 = sld [smem:[#allocation0]]
  $region18: #{tpu_custom_call.1} parent=0
    _
  %s5 = ssub.s32 1, %s3
  %s6 = scalar_select 0, %s5, %s3
  $region1: #{tpu_custom_call.1} parent=0
    #allocation2 [shape = 'u8[4096]{0}', space=vmem, size = 0x1000, scoped, tag = 'output window, operand 0, single buffered']
    #allocation3 [shape = 's32[1]{0}', space=sflag, size = 0x4, scoped, tag = 'scoped memory for tpu_custom_call.1']
    %7 = vsyncpa [#allocation3], 0
    // Predicated region
    $region2: #{tpu_custom_call.1} parent=1 // pred_check
      _
    $region3: #{tpu_custom_call.1} parent=1 // pred_check_branch
      %9 = sbr.rel (0) target = $region5
    $region4: #{tpu_custom_call.1} parent=1 // pred_region
      _
    $region5: #{tpu_custom_call.1} parent=1 // pred_fallthru
      _
    // Predicated region
    $region6: #{tpu_custom_call.1} parent=1 // pred_check
      _
    $region7: #{tpu_custom_call.1} parent=1 // pred_check_branch
      %11 = sbr.rel (0) target = $region9
    $region8: #{tpu_custom_call.1} parent=1 // pred_region
      _
    $region9: #{tpu_custom_call.1} parent=1 // pred_fallthru
      _
    %v12 = vld [vmem:[%s0] sm:$0xff]
    %v13 = vld [vmem:[%s0 + $0x8] sm:$0xff]
    %v14 = vld [vmem:[%s1] sm:$0xff]
    %v15 = vld [vmem:[%s1 + $0x8] sm:$0xff]
    %vm16 = vcmask 261120
    %v17 = vsel %vm16, %v12, -inf
    %18 = vmax.xlane.f32.xlu0 %v17
    %v19 = vpop.xlane.xlu0 %18
    %v20 = vsel %vm16, %v13, -inf
    %21 = vmax.xlane.f32.xlu0 %v20
    %v22 = vpop.xlane.xlu0 %21
    %v23 = vsub.f32 %v12, %v19
    %v24 = vsub.f32 %v13, %v22
    %v25 = vlaneseq
    %v26 = vand.u32 %v25, 127
    %27 = vset.pattern.permute.xlu0 0
    %28 = vperm.xlu0 %27, %v14
    %v29 = vpop.permute.xlu0 %28
    %30 = vset.pattern.permute.xlu0 0
    %31 = vperm.xlu0 %30, %v15
    %v32 = vpop.permute.xlu0 %31
    %vm33 = vcmp.eq.s32.totalorder %v26, %v29
    %vm34 = vcmp.eq.s32.totalorder %v26, %v32
    %v35 = vsel %vm33, %v23, 0.0
    %v36 = vsel %vm34, %v24, 0.0
    %v37 = vsel %vm16, %v35, 0.0
    %38 = vadd.xlane.f32.xlu0 %v37
    %v39 = vpop.xlane.xlu0 %38
    %v40 = vsel %vm16, %v36, 0.0
    %41 = vadd.xlane.f32.xlu0 %v40
    %v42 = vpop.xlane.xlu0 %41
    %v43 = vmul.f32 %v23, 1.442695
    %v44 = vpow.pop %v43
    %v45 = vmul.f32 %v24, 1.442695
    %v46 = vpow.pop %v45
    %v47 = vsel %vm16, %v44, 0.0
    %48 = vadd.xlane.f32.xlu0 %v47
    %v49 = vpop.xlane.xlu0 %48
    %v50 = vsel %vm16, %v46, 0.0
    %51 = vadd.xlane.f32.xlu0 %v50
    %v52 = vpop.xlane.xlu0 %51
    %v53 = vlog2.pop %v49
    %v54 = vmul.f32 %v53, 0.6931472
    %v55 = vlog2.pop %v52
    %v56 = vmul.f32 %v55, 0.6931472
    %vm57 = vcmp.ne.s32.totalorder %v14, 4294967196
    %vm58 = vcmp.ne.s32.totalorder %v15, 4294967196
    %v59 = vsub.f32 %v54, %v39
    %v60 = vsub.f32 %v56, %v42
    %v61 = vsel %vm57, %v59, 0.0
    %v62 = vsel %vm58, %v60, 0.0
    %vm63 = vcmask 7168
    %v64 = vsel %vm63, %v61, 0.0
    %v65 = vsel %vm63, %v62, 0.0
    %v66 = vadd.f32 %v64, %v65
    %67 = vadd.xlane.f32.xlu0 %v66
    %v68 = vpop.xlane.xlu0 %67
    %v69 = vrot.slane %v68, 4
    %v70 = vadd.f32 %v68, %v69
    %v71 = vrot.slane %v70, 2
    %v72 = vadd.f32 %v70, %v71
    %v73 = vrot.slane %v72, 1
    %v74 = vadd.f32 %v72, %v73
    %s75 = vtos %v74
    %v76 = vsel %vm57, 1, 0
    %v77 = vsel %vm58, 1, 0
    %v78 = vcvt.s32.f32 %v76
    %v79 = vcvt.s32.f32 %v77
    %v80 = vsel %vm63, %v78, 0.0
    %v81 = vsel %vm63, %v79, 0.0
    %v82 = vadd.f32 %v80, %v81
    %83 = vadd.xlane.f32.xlu0 %v82
    %v84 = vpop.xlane.xlu0 %83
    %v85 = vrot.slane %v84, 4
    %v86 = vadd.f32 %v84, %v85
    %v87 = vrot.slane %v86, 2
    %v88 = vadd.f32 %v86, %v87
    %v89 = vrot.slane %v88, 1
    %v90 = vadd.f32 %v88, %v89
    %s91 = vtos %v90
    %v92 = vlaneseq
    %v93 = vshrl.u32 %v92, 7
    %vm94 = vcmp.eq.s32.totalorder %v93, 0
    %vm95 = vcmp.eq.s32.totalorder %v26, 0
    %vm96 = vmand %vm94, %vm95
    %vm97 = vcmp.eq.s32.totalorder %v26, 1
    %vm98 = vmand %vm94, %vm97
    %v99 = vstv %s91
    %v100 = vsel %vm98, %v99, 0.0
    %v101 = vstv %s75
    %v102 = vsel %vm96, %v101, %v100
    %103 = vst [vmem:[#allocation2] sm:$0xff] %v102
    // Predicated region
    $region10: #{tpu_custom_call.1} parent=1 // pred_check
      _
    $region11: #{tpu_custom_call.1} parent=1 // pred_check_branch
      %105 = sbr.rel (0) target = $region13
    $region12: #{tpu_custom_call.1} parent=1 // pred_region
      %s107 = ssub.s32 128, 128
      %108 = vsyncadd [#allocation3], %s107
      %s110 = sshll.u32 [#allocation2], 4
      %s111 = int_to_ptr.vmem [resolvable:$true] %s110
      %113 = dma.vmem_to_hbm [thread:$0]  %s111, 128, %s2, [#allocation3]
    $region13: #{tpu_custom_call.1} parent=1 // pred_fallthru
      _
    // Predicated region
    $region14: #{tpu_custom_call.1} parent=1 // pred_check
      _
    $region15: #{tpu_custom_call.1} parent=1 // pred_check_branch
      %115 = sbr.rel (0) target = $region17
    $region16: #{tpu_custom_call.1} parent=1 // pred_region
      %116 = dma.done [#allocation3], 128
    $region17: #{tpu_custom_call.1} parent=1 // pred_fallthru
      _
    %117 = vsyncpa [#allocation3], 1

</llo_original>
